<compile_context>
chip_gen: v7x
topology: tpu7x:2x2x1
jax: 0.10.0
libtpu: 0.0.40
codegen_flags: <defaults>
</compile_context>

<pallas_src>
import jax
import jax.numpy as jnp
from jax.experimental import pallas as pl
from jax.experimental.pallas import tpu as pltpu


def _copygen_kernel(hidden_ref, w_ref, b_ref, wc_ref, bc_ref, attn_ref,
                    sm_ref, rowmod_ref, out_ref):
    """Fused CopyGenerator forward for one row tile.

    hidden_ref : (TM, D)           w_ref  : (D, V)   b_ref : (1, V) (pad col = -inf)
    wc_ref     : (D, 1)            bc_ref : (1, 1)
    attn_ref   : (TM, S)           sm_ref : (batch*S, C)  (batch-major src_map)
    rowmod_ref : (TM, 1) int32     out_ref: (TM, V + C)
    """
    TM = hidden_ref.shape[0]
    V = w_ref.shape[1]
    S = attn_ref.shape[1]
    C = sm_ref.shape[1]
    batch = sm_ref.shape[0] // S

    h = hidden_ref[...]                                        # (TM, D)

    # ---- vocab logits + masked softmax (pad column already -inf via bias) --
    logits = jnp.dot(h, w_ref[...],
                     preferred_element_type=jnp.float32) + b_ref[...]
    m = jnp.max(logits, axis=-1, keepdims=True)
    e = jnp.exp(logits - m)                                    # exp(-inf) -> 0
    denom = jnp.sum(e, axis=-1, keepdims=True)
    prob = e * pl.reciprocal(denom, approx=True)               # (TM, V)

    # ---- copy switch: tiny MXU matvec instead of VPU mul + XLU reduce ------
    z = jnp.dot(h, wc_ref[...],
                preferred_element_type=jnp.float32) + bc_ref[...]
    p_copy = jax.nn.sigmoid(z)                                 # (TM, 1)

    out_ref[:, :V] = prob * (1.0 - p_copy)

    # ---- fused copy-attention contraction (mul_attn never leaves VMEM) -----
    ma = attn_ref[...] * p_copy                                # (TM, S) f32
    row_mod = rowmod_ref[...]                                  # (TM, 1) = row % batch
    cp = jnp.zeros((TM, C), jnp.float32)
    for bb in range(batch):                                    # static, small
        sm_b = sm_ref[pl.ds(bb * S, S), :]                     # (S, C)
        cp_b = jnp.dot(ma, sm_b, preferred_element_type=jnp.float32)
        cp = jnp.where(row_mod == bb, cp_b, cp)
    out_ref[:, V:] = cp


def _pick_row_block(N, batch, target):
    """Largest row tile <= target that divides N, is a multiple of `batch`
    (so row%batch is tile-invariant) and sublane-friendly."""
    for d in range(min(N, target), 0, -1):
        if N % d == 0 and d % batch == 0 and (d % 8 == 0 or d == N):
            return d
    return N


def copy_generator_forward(hidden, attn, src_map, W, b, w_copy, b_copy,
                           pad_idx, *, row_block=256,
                           matmul_dtype=jnp.float32):
    """JAX/Pallas equivalent of CopyGenerator.forward. Returns (N, V + C)."""
    N, D = hidden.shape
    N2, S = attn.shape
    S2, batch, C = src_map.shape
    V, D2 = W.shape
    assert N == N2 and S == S2 and D == D2 and N % batch == 0

    TM = _pick_row_block(N, batch, row_block)
    nt = N // TM

    # Fold the pad mask into the bias: finite + (-inf) = -inf, so
    # logits[:, pad_idx] is -inf without any iota/where in the kernel.
    b_masked = b.astype(jnp.float32).at[pad_idx].set(-jnp.inf).reshape(1, V)

    w_t = W.T.astype(matmul_dtype)                       # (D, V)  resident
    wc = w_copy.reshape(D, 1).astype(matmul_dtype)       # (D, 1)  resident
    bc = b_copy.astype(jnp.float32).reshape(1, 1)        # (1, 1)
    hid = hidden.astype(matmul_dtype)                    # streamed

    # src_map (S, batch, C) -> (batch*S, C): per-batch (S, C) slabs selectable
    # with a static leading-dim slice inside the kernel (tiny array).
    sm2 = jnp.transpose(src_map, (1, 0, 2)).reshape(batch * S, C)
    sm2 = sm2.astype(jnp.float32)

    # Per-row batch id within a tile (rows are t-major, TM % batch == 0), so
    # the kernel needs no vector integer modulo.
    row_mod = (jnp.arange(TM, dtype=jnp.int32) % batch).reshape(TM, 1)

    out = pl.pallas_call(
        _copygen_kernel,
        out_shape=jax.ShapeDtypeStruct((N, V + C), jnp.float32),
        grid=(nt,),
        in_specs=[
            pl.BlockSpec((TM, D), lambda i: (i, 0)),           # hidden (stream)
            pl.BlockSpec((D, V), lambda i: (0, 0)),            # W^T   (resident)
            pl.BlockSpec((1, V), lambda i: (0, 0)),            # bias  (pad=-inf)
            pl.BlockSpec((D, 1), lambda i: (0, 0)),            # w_copy
            pl.BlockSpec((1, 1), lambda i: (0, 0)),            # b_copy
            pl.BlockSpec((TM, S), lambda i: (i, 0)),           # attn  (stream)
            pl.BlockSpec((batch * S, C), lambda i: (0, 0)),    # src_map
            pl.BlockSpec((TM, 1), lambda i: (0, 0)),           # row % batch
        ],
        out_specs=pl.BlockSpec((TM, V + C), lambda i: (i, 0)),
        compiler_params=pltpu.CompilerParams(
            dimension_semantics=("parallel",)),
    )(hid, w_t, b_masked, wc, bc, attn, sm2, row_mod)
    return out


def _reference(hidden, attn, src_map, W, b, w_copy, b_copy, pad_idx):
    """Pure-JAX reference mirroring the PyTorch code."""
    N, D = hidden.shape
    _, S = attn.shape
    _, batch, C = src_map.shape
    T = N // batch
    logits = hidden @ W.T + b
    logits = logits.at[:, pad_idx].set(-jnp.inf)
    prob = jax.nn.softmax(logits, axis=1)
    p_copy = jax.nn.sigmoid(hidden @ w_copy.T + b_copy)          # (N, 1)
    out_prob = prob * (1.0 - p_copy)
    mul_attn = attn * p_copy
    cp = jnp.einsum('bts,bsc->btc',
                    jnp.transpose(mul_attn.reshape(T, batch, S), (1, 0, 2)),
                    jnp.transpose(src_map, (1, 0, 2)))
    cp = jnp.transpose(cp, (1, 0, 2)).reshape(N, C)
    return jnp.concatenate([out_prob, cp], axis=1)


if __name__ == "__main__":
    # Small, deterministic problem (rows of hidden are t-major: row = t*batch+b).
    batch, tlen = 2, 32
    N = batch * tlen               # 64
    D = 32                         # input_size
    V = 16                         # output_size (tgt vocab)
    S = 8                          # slen
    C = 8                          # cvocab (extra words)
    pad_idx = 1

    key = jax.random.PRNGKey(0)
    k0, k1, k2, k3, k4, k5, k6 = jax.random.split(key, 7)

    hidden = jax.random.normal(k0, (N, D), dtype=jnp.float32)
    attn = jax.nn.softmax(jax.random.normal(k1, (N, S), dtype=jnp.float32),
                          axis=-1)
    src_map = jax.nn.one_hot(
        jax.random.randint(k2, (S, batch), 0, C), C, dtype=jnp.float32)

    # nn.Linear(input_size, output_size) / nn.Linear(input_size, 1) params
    W = 0.1 * jax.random.normal(k3, (V, D), dtype=jnp.float32)
    b = 0.1 * jax.random.normal(k4, (V,), dtype=jnp.float32)
    w_copy = 0.1 * jax.random.normal(k5, (1, D), dtype=jnp.float32)
    b_copy = 0.1 * jax.random.normal(k6, (1,), dtype=jnp.float32)

    ref = _reference(hidden, attn, src_map, W, b, w_copy, b_copy, pad_idx)

    # f32 path (row_block=16 -> grid of 4 row tiles, exercises the pipeline).
    out = copy_generator_forward(hidden, attn, src_map, W, b, w_copy, b_copy,
                                 pad_idx, row_block=16)
    out = jax.block_until_ready(out)
    assert out.shape == (N, V + C), out.shape
    assert jnp.allclose(out, ref, atol=1e-3, rtol=1e-3), "f32 mismatch vs ref"

    # bf16 weight/activation streaming for the MXU (softmax still f32).
    out_bf16 = copy_generator_forward(hidden, attn, src_map, W, b, w_copy,
                                      b_copy, pad_idx, row_block=16,
                                      matmul_dtype=jnp.bfloat16)
    out_bf16 = jax.block_until_ready(out_bf16)
    assert jnp.allclose(out_bf16, ref, atol=2e-2, rtol=2e-2), "bf16 mismatch"

    print("KERNEL_OK")
</pallas_src>

<mosaic_0001>
module attributes {stable_mosaic.version = 11 : i64} {
  func.func @_copygen_kernel(%arg0: i32, %arg1: memref<16x32xf32, #tpu.memory_space<vmem>>, %arg2: memref<32x16xf32, #tpu.memory_space<vmem>>, %arg3: memref<1x16xf32, #tpu.memory_space<vmem>>, %arg4: memref<32x1xf32, #tpu.memory_space<vmem>>, %arg5: memref<1x1xf32, #tpu.memory_space<vmem>>, %arg6: memref<16x8xf32, #tpu.memory_space<vmem>>, %arg7: memref<16x8xf32, #tpu.memory_space<vmem>>, %arg8: memref<16x1xi32, #tpu.memory_space<vmem>>, %arg9: memref<16x24xf32, #tpu.memory_space<vmem>>) attributes {dimension_semantics = [#tpu.dimension_semantics<parallel>], iteration_bounds = array<i64: 4>, scalar_prefetch = 0 : i64, scratch_operands = 0 : i64, tpu.core_type = #tpu.core_type<tc>, window_params = [{transform_indices = @transform_0, window_bounds = array<i64: 16, 32>}, {pipeline_mode = #tpu.pipeline_mode<synchronous>, transform_indices = @transform_1, window_bounds = array<i64: 32, 16>}, {pipeline_mode = #tpu.pipeline_mode<synchronous>, transform_indices = @transform_2, window_bounds = array<i64: 1, 16>}, {pipeline_mode = #tpu.pipeline_mode<synchronous>, transform_indices = @transform_3, window_bounds = array<i64: 32, 1>}, {pipeline_mode = #tpu.pipeline_mode<synchronous>, transform_indices = @transform_4, window_bounds = array<i64: 1, 1>}, {transform_indices = @transform_5, window_bounds = array<i64: 16, 8>}, {pipeline_mode = #tpu.pipeline_mode<synchronous>, transform_indices = @transform_6, window_bounds = array<i64: 16, 8>}, {pipeline_mode = #tpu.pipeline_mode<synchronous>, transform_indices = @transform_7, window_bounds = array<i64: 16, 1>}, {transform_indices = @transform_8, window_bounds = array<i64: 16, 24>}]} {
    %c0 = arith.constant 0 : index
    %c0_0 = arith.constant 0 : index
    %0 = vector.load %arg1[%c0, %c0_0] : memref<16x32xf32, #tpu.memory_space<vmem>>, vector<16x32xf32>
    %c0_1 = arith.constant 0 : index
    %c0_2 = arith.constant 0 : index
    %1 = vector.load %arg2[%c0_1, %c0_2] : memref<32x16xf32, #tpu.memory_space<vmem>>, vector<32x16xf32>
    %cst = arith.constant dense<0.000000e+00> : vector<16x16xf32>
    %2 = tpu.matmul %0, %1, %cst {dimension_numbers = #tpu.dot_dimension_numbers<[1], [0], [0], [1], [0, 0, 1, 1], [], []>} : vector<16x32xf32>, vector<32x16xf32>, vector<16x16xf32> -> vector<16x16xf32>
    %c0_3 = arith.constant 0 : index
    %c0_4 = arith.constant 0 : index
    %3 = vector.load %arg3[%c0_3, %c0_4] : memref<1x16xf32, #tpu.memory_space<vmem>>, vector<1x16xf32>
    %4 = vector.broadcast %3 : vector<1x16xf32> to vector<16x16xf32>
    %5 = arith.addf %2, %4 : vector<16x16xf32>
    %cst_5 = arith.constant dense<0xFF800000> : vector<16xf32>
    %6 = vector.multi_reduction <maximumf>, %5, %cst_5 [1] : vector<16x16xf32> to vector<16xf32>
    %7 = vector.shape_cast %6 : vector<16xf32> to vector<16x1xf32>
    %8 = vector.broadcast %7 : vector<16x1xf32> to vector<16x16xf32>
    %9 = arith.subf %5, %8 : vector<16x16xf32>
    %10 = math.exp %9 : vector<16x16xf32>
    %cst_6 = arith.constant dense<0.000000e+00> : vector<16xf32>
    %11 = vector.multi_reduction <add>, %10, %cst_6 [1] : vector<16x16xf32> to vector<16xf32>
    %12 = vector.shape_cast %11 : vector<16xf32> to vector<16x1xf32>
    %13 = tpu.reciprocal %12 {approx = true} : vector<16x1xf32> -> vector<16x1xf32>
    %14 = vector.broadcast %13 : vector<16x1xf32> to vector<16x16xf32>
    %15 = arith.mulf %10, %14 : vector<16x16xf32>
    %c0_7 = arith.constant 0 : index
    %c0_8 = arith.constant 0 : index
    %16 = vector.load %arg4[%c0_7, %c0_8] : memref<32x1xf32, #tpu.memory_space<vmem>>, vector<32x1xf32>
    %cst_9 = arith.constant dense<0.000000e+00> : vector<16x1xf32>
    %17 = tpu.matmul %0, %16, %cst_9 {dimension_numbers = #tpu.dot_dimension_numbers<[1], [0], [0], [1], [0, 0, 1, 1], [], []>} : vector<16x32xf32>, vector<32x1xf32>, vector<16x1xf32> -> vector<16x1xf32>
    %c0_10 = arith.constant 0 : index
    %c0_11 = arith.constant 0 : index
    %18 = vector.load %arg5[%c0_10, %c0_11] : memref<1x1xf32, #tpu.memory_space<vmem>>, vector<1x1xf32>
    %19 = vector.broadcast %18 : vector<1x1xf32> to vector<16x1xf32>
    %20 = arith.addf %17, %19 : vector<16x1xf32>
    %21 = arith.negf %20 : vector<16x1xf32>
    %22 = math.exp %21 : vector<16x1xf32>
    %cst_12 = arith.constant 1.000000e+00 : f32
    %23 = vector.broadcast %cst_12 : f32 to vector<16x1xf32>
    %24 = arith.addf %23, %22 : vector<16x1xf32>
    %25 = arith.divf %23, %24 : vector<16x1xf32>
    %cst_13 = arith.constant 1.000000e+00 : f32
    %26 = vector.broadcast %cst_13 : f32 to vector<16x1xf32>
    %27 = arith.subf %26, %25 : vector<16x1xf32>
    %28 = vector.broadcast %27 : vector<16x1xf32> to vector<16x16xf32>
    %29 = arith.mulf %15, %28 : vector<16x16xf32>
    %c0_14 = arith.constant 0 : index
    %c0_15 = arith.constant 0 : index
    %30 = vector.load %arg9[%c0_14, %c0_15] : memref<16x24xf32, #tpu.memory_space<vmem>>, vector<16x16xf32>
    tpu.vector_store %arg9[%c0_14, %c0_15], %29 {strides = array<i32>} : memref<16x24xf32, #tpu.memory_space<vmem>>, vector<16x16xf32>,
    %c0_16 = arith.constant 0 : index
    %c0_17 = arith.constant 0 : index
    %31 = vector.load %arg6[%c0_16, %c0_17] : memref<16x8xf32, #tpu.memory_space<vmem>>, vector<16x8xf32>
    %32 = vector.broadcast %25 : vector<16x1xf32> to vector<16x8xf32>
    %33 = arith.mulf %31, %32 : vector<16x8xf32>
    %c0_18 = arith.constant 0 : index
    %c0_19 = arith.constant 0 : index
    %34 = vector.load %arg8[%c0_18, %c0_19] : memref<16x1xi32, #tpu.memory_space<vmem>>, vector<16x1xi32>
    %cst_20 = arith.constant 0.000000e+00 : f32
    %35 = vector.broadcast %cst_20 : f32 to vector<16x8xf32>
    %c0_21 = arith.constant 0 : index
    %c0_22 = arith.constant 0 : index
    %36 = vector.load %arg7[%c0_21, %c0_22] : memref<16x8xf32, #tpu.memory_space<vmem>>, vector<8x8xf32>
    %cst_23 = arith.constant dense<0.000000e+00> : vector<16x8xf32>
    %37 = tpu.matmul %33, %36, %cst_23 {dimension_numbers = #tpu.dot_dimension_numbers<[1], [0], [0], [1], [0, 0, 1, 1], [], []>} : vector<16x8xf32>, vector<8x8xf32>, vector<16x8xf32> -> vector<16x8xf32>
    %c0_i32 = arith.constant 0 : i32
    %38 = vector.broadcast %c0_i32 : i32 to vector<16x1xi32>
    %39 = arith.cmpi eq, %34, %38 : vector<16x1xi32>
    %40 = vector.shape_cast %39 : vector<16x1xi1> to vector<16x1xi1>
    %41 = vector.broadcast %40 : vector<16x1xi1> to vector<16x8xi1>
    %42 = arith.select %41, %37, %35 : vector<16x8xi1>, vector<16x8xf32>
    %c8 = arith.constant 8 : index
    %c0_24 = arith.constant 0 : index
    %43 = vector.load %arg7[%c8, %c0_24] : memref<16x8xf32, #tpu.memory_space<vmem>>, vector<8x8xf32>
    %cst_25 = arith.constant dense<0.000000e+00> : vector<16x8xf32>
    %44 = tpu.matmul %33, %43, %cst_25 {dimension_numbers = #tpu.dot_dimension_numbers<[1], [0], [0], [1], [0, 0, 1, 1], [], []>} : vector<16x8xf32>, vector<8x8xf32>, vector<16x8xf32> -> vector<16x8xf32>
    %c1_i32 = arith.constant 1 : i32
    %45 = vector.broadcast %c1_i32 : i32 to vector<16x1xi32>
    %46 = arith.cmpi eq, %34, %45 : vector<16x1xi32>
    %47 = vector.shape_cast %46 : vector<16x1xi1> to vector<16x1xi1>
    %48 = vector.broadcast %47 : vector<16x1xi1> to vector<16x8xi1>
    %49 = arith.select %48, %44, %42 : vector<16x8xi1>, vector<16x8xf32>
    %c0_26 = arith.constant 0 : index
    %c16 = arith.constant 16 : index
    %50 = vector.load %arg9[%c0_26, %c16] : memref<16x24xf32, #tpu.memory_space<vmem>>, vector<16x8xf32>
    tpu.vector_store %arg9[%c0_26, %c16], %49 {strides = array<i32>} : memref<16x24xf32, #tpu.memory_space<vmem>>, vector<16x8xf32>,
    return
  }
  func.func @transform_0(%arg0: i32) -> (i32, i32) {
    %c0_i32 = arith.constant 0 : i32
    %c0_i32_0 = arith.constant 0 : i32
    return %arg0, %c0_i32 : i32, i32
  }
  func.func @transform_1(%arg0: i32) -> (i32, i32) {
    %c0_i32 = arith.constant 0 : i32
    %c0_i32_0 = arith.constant 0 : i32
    %c0_i32_1 = arith.constant 0 : i32
    return %c0_i32, %c0_i32_0 : i32, i32
  }
  func.func @transform_2(%arg0: i32) -> (i32, i32) {
    %c0_i32 = arith.constant 0 : i32
    %c0_i32_0 = arith.constant 0 : i32
    %c0_i32_1 = arith.constant 0 : i32
    return %c0_i32, %c0_i32_0 : i32, i32
  }
  func.func @transform_3(%arg0: i32) -> (i32, i32) {
    %c0_i32 = arith.constant 0 : i32
    %c0_i32_0 = arith.constant 0 : i32
    %c0_i32_1 = arith.constant 0 : i32
    return %c0_i32, %c0_i32_0 : i32, i32
  }
  func.func @transform_4(%arg0: i32) -> (i32, i32) {
    %c0_i32 = arith.constant 0 : i32
    %c0_i32_0 = arith.constant 0 : i32
    %c0_i32_1 = arith.constant 0 : i32
    return %c0_i32, %c0_i32_0 : i32, i32
  }
  func.func @transform_5(%arg0: i32) -> (i32, i32) {
    %c0_i32 = arith.constant 0 : i32
    %c0_i32_0 = arith.constant 0 : i32
    return %arg0, %c0_i32 : i32, i32
  }
  func.func @transform_6(%arg0: i32) -> (i32, i32) {
    %c0_i32 = arith.constant 0 : i32
    %c0_i32_0 = arith.constant 0 : i32
    %c0_i32_1 = arith.constant 0 : i32
    return %c0_i32, %c0_i32_0 : i32, i32
  }
  func.func @transform_7(%arg0: i32) -> (i32, i32) {
    %c0_i32 = arith.constant 0 : i32
    %c0_i32_0 = arith.constant 0 : i32
    %c0_i32_1 = arith.constant 0 : i32
    return %c0_i32, %c0_i32_0 : i32, i32
  }
  func.func @transform_8(%arg0: i32) -> (i32, i32) {
    %c0_i32 = arith.constant 0 : i32
    %c0_i32_0 = arith.constant 0 : i32
    return %arg0, %c0_i32 : i32, i32
  }
}

</mosaic_0001>

<llo_original>
// kernel: tpu_custom_call.1
$region0: #{tpu_custom_call.1}
  #allocation0 [shape = 'u32[]', space=smem, size = 0x4, offset = 0x4, fixed_abs, tag = 'smem constant byte address 0x4 - core index']
  #allocation1 [shape = 'u32[144,128]{1,0:T(1,128)}', space=vmem, size = 0x12000, scoped, tag = 'internal scratch']
  #allocation2 [shape = 'f32[1,1]{1,0:T(1,128)S(1)}', space=vmem, size = 0x200, scoped, tag = 'scoped memory for tpu_custom_call.1']
  %s0 = inlined_call_operand.vmem [shape: f32[64,32], index: 0, kind: input, shape index: {}]
  %s1 = inlined_call_operand.vmem [shape: f32[32,16], index: 1, kind: input, shape index: {}]
  %s2 = inlined_call_operand.vmem [shape: f32[1,16], index: 2, kind: input, shape index: {}]
  %s3 = inlined_call_operand.vmem [shape: f32[32,1], index: 3, kind: input, shape index: {}]
  %s4 = inlined_call_operand.<no memory space> [shape: f32[1,1], index: 4, kind: input, shape index: {}]
  %s5 = inlined_call_operand.vmem [shape: f32[64,8], index: 5, kind: input, shape index: {}]
  %s6 = inlined_call_operand.vmem [shape: f32[16,8], index: 6, kind: input, shape index: {}]
  %s7 = inlined_call_operand.vmem [shape: s32[16,1], index: 7, kind: input, shape index: {}]
  %s8 = inlined_call_operand.vmem [shape: f32[64,24], index: 8, kind: output, shape index: {}]
  %s9 = sld [smem:[#allocation0]]
  $region65: #{tpu_custom_call.1} parent=0
    _
  %s11 = ssub.s32 1, %s9
  %s12 = scalar_select 0, %s11, %s9
  %v13 = vstv %s4
  %14 = vst [vmem:[#allocation2] sm:$0x1] %v13
  loop: start=0, step=1, limit=6
  $region2: #{tpu_custom_call.1} parent=0 // loop_pre_header
    _
  $region3: #{tpu_custom_call.1} parent=0 // loop_header
    %s16 = sphi 0, %s20
    %p17 = scmp.ge.s32.totalorder %s16, 6
    %s26 = sphi 0, %s28
    %s29 = sphi 0, %s26
    %s30 = sphi 0, %s29
    %s46 = sphi 0, %s30
    %s50 = sphi 0, %s50
    %s52 = sphi 0, %s50
    %s53 = sphi 0, %s52
    %s67 = sphi 0, %s53
    %s71 = sphi 0, %s71
    %s73 = sphi 0, %s71
    %s74 = sphi 0, %s73
    %s88 = sphi 0, %s74
    %s92 = sphi 0, %s92
    %s94 = sphi 0, %s92
    %s95 = sphi 0, %s94
    %s109 = sphi 0, %s95
    %s113 = sphi 0, %s113
    %s115 = sphi 0, %s113
    %s116 = sphi 0, %s115
    %s130 = sphi 0, %s116
    %s136 = sphi 0, %s138
    %s139 = sphi 0, %s136
    %s140 = sphi 0, %s139
    %s156 = sphi 0, %s140
    %s160 = sphi 0, %s160
    %s162 = sphi 0, %s160
    %s163 = sphi 0, %s162
    %s177 = sphi 0, %s163
    %s181 = sphi 0, %s181
    %s183 = sphi 0, %s181
    %s184 = sphi 0, %s183
    %s198 = sphi 0, %s184
    %s204 = sphi 0, %s206
    %s207 = sphi 0, %s204
    %s208 = sphi 0, %s207
    %s224 = sphi 0, %s208
  $region4: #{tpu_custom_call.1} parent=0 // loop_header_branch
    %19 = sbr.rel (%p17) target = $region8
  $region5: #{tpu_custom_call.1} parent=0 // loop_body
    %s21 = ssub.s32 %s16, 1
    %s22 = ssub.s32 %s16, 2
    %s23 = sadd.s32 %s16, 1
    %s24 = ssub.s32 %s16, %s23
    %p25 = scmp.eq.s32.totalorder %s24, 0
    %s27 = sadd.s32 %s26, 1
    %s28 = scalar_select %p25, %s26, %s27
    %p31 = pneg %p25
    %p32 = scmp.eq.s32.totalorder %s16, 3
    %p33 = por %p31, %p32
    %p34 = scmp.ne.s32.totalorder %s26, %s29
    %p35 = scmp.eq.s32.totalorder %s16, 0
    %p36 = por %p34, %p35
    %p37 = scmp.ne.s32.totalorder %s26, %s29
    %p38 = scmp.eq.s32.totalorder %s21, 3
    %p39 = por %p37, %p38
    %p40 = scmp.ne.s32.totalorder %s29, %s30
    %p41 = scmp.eq.s32.totalorder %s21, 0
    %p42 = por %p40, %p41
    %p43 = scmp.ne.s32.totalorder %s29, %s30
    %p44 = scmp.eq.s32.totalorder %s22, 3
    %p45 = por %p43, %p44
    %p47 = scmp.ne.s32.totalorder %s30, %s46
    %p48 = scmp.eq.s32.totalorder %s22, 0
    %p49 = por %p47, %p48
    %s51 = sadd.s32 %s50, 1
    %p54 = scmp.eq.s32.totalorder %s16, 3
    %p55 = scmp.ne.s32.totalorder %s50, %s52
    %p56 = scmp.eq.s32.totalorder %s16, 0
    %p57 = por %p55, %p56
    %p58 = scmp.ne.s32.totalorder %s50, %s52
    %p59 = scmp.eq.s32.totalorder %s21, 3
    %p60 = por %p58, %p59
    %p61 = scmp.ne.s32.totalorder %s52, %s53
    %p62 = scmp.eq.s32.totalorder %s21, 0
    %p63 = por %p61, %p62
    %p64 = scmp.ne.s32.totalorder %s52, %s53
    %p65 = scmp.eq.s32.totalorder %s22, 3
    %p66 = por %p64, %p65
    %p68 = scmp.ne.s32.totalorder %s53, %s67
    %p69 = scmp.eq.s32.totalorder %s22, 0
    %p70 = por %p68, %p69
    %s72 = sadd.s32 %s71, 1
    %p75 = scmp.eq.s32.totalorder %s16, 3
    %p76 = scmp.ne.s32.totalorder %s71, %s73
    %p77 = scmp.eq.s32.totalorder %s16, 0
    %p78 = por %p76, %p77
    %p79 = scmp.ne.s32.totalorder %s71, %s73
    %p80 = scmp.eq.s32.totalorder %s21, 3
    %p81 = por %p79, %p80
    %p82 = scmp.ne.s32.totalorder %s73, %s74
    %p83 = scmp.eq.s32.totalorder %s21, 0
    %p84 = por %p82, %p83
    %p85 = scmp.ne.s32.totalorder %s73, %s74
    %p86 = scmp.eq.s32.totalorder %s22, 3
    %p87 = por %p85, %p86
    %p89 = scmp.ne.s32.totalorder %s74, %s88
    %p90 = scmp.eq.s32.totalorder %s22, 0
    %p91 = por %p89, %p90
    %s93 = sadd.s32 %s92, 1
    %p96 = scmp.eq.s32.totalorder %s16, 3
    %p97 = scmp.ne.s32.totalorder %s92, %s94
    %p98 = scmp.eq.s32.totalorder %s16, 0
    %p99 = por %p97, %p98
    %p100 = scmp.ne.s32.totalorder %s92, %s94
    %p101 = scmp.eq.s32.totalorder %s21, 3
    %p102 = por %p100, %p101
    %p103 = scmp.ne.s32.totalorder %s94, %s95
    %p104 = scmp.eq.s32.totalorder %s21, 0
    %p105 = por %p103, %p104
    %p106 = scmp.ne.s32.totalorder %s94, %s95
    %p107 = scmp.eq.s32.totalorder %s22, 3
    %p108 = por %p106, %p107
    %p110 = scmp.ne.s32.totalorder %s95, %s109
    %p111 = scmp.eq.s32.totalorder %s22, 0
    %p112 = por %p110, %p111
    %s114 = sadd.s32 %s113, 1
    %p117 = scmp.eq.s32.totalorder %s16, 3
    %p118 = scmp.ne.s32.totalorder %s113, %s115
    %p119 = scmp.eq.s32.totalorder %s16, 0
    %p120 = por %p118, %p119
    %p121 = scmp.ne.s32.totalorder %s113, %s115
    %p122 = scmp.eq.s32.totalorder %s21, 3
    %p123 = por %p121, %p122
    %p124 = scmp.ne.s32.totalorder %s115, %s116
    %p125 = scmp.eq.s32.totalorder %s21, 0
    %p126 = por %p124, %p125
    %p127 = scmp.ne.s32.totalorder %s115, %s116
    %p128 = scmp.eq.s32.totalorder %s22, 3
    %p129 = por %p127, %p128
    %p131 = scmp.ne.s32.totalorder %s116, %s130
    %p132 = scmp.eq.s32.totalorder %s22, 0
    %p133 = por %p131, %p132
    %s134 = ssub.s32 %s16, %s23
    %p135 = scmp.eq.s32.totalorder %s134, 0
    %s137 = sadd.s32 %s136, 1
    %s138 = scalar_select %p135, %s136, %s137
    %p141 = pneg %p135
    %p142 = scmp.eq.s32.totalorder %s16, 3
    %p143 = por %p141, %p142
    %p144 = scmp.ne.s32.totalorder %s136, %s139
    %p145 = scmp.eq.s32.totalorder %s16, 0
    %p146 = por %p144, %p145
    %p147 = scmp.ne.s32.totalorder %s136, %s139
    %p148 = scmp.eq.s32.totalorder %s21, 3
    %p149 = por %p147, %p148
    %p150 = scmp.ne.s32.totalorder %s139, %s140
    %p151 = scmp.eq.s32.totalorder %s21, 0
    %p152 = por %p150, %p151
    %p153 = scmp.ne.s32.totalorder %s139, %s140
    %p154 = scmp.eq.s32.totalorder %s22, 3
    %p155 = por %p153, %p154
    %p157 = scmp.ne.s32.totalorder %s140, %s156
    %p158 = scmp.eq.s32.totalorder %s22, 0
    %p159 = por %p157, %p158
    %s161 = sadd.s32 %s160, 1
    %p164 = scmp.eq.s32.totalorder %s16, 3
    %p165 = scmp.ne.s32.totalorder %s160, %s162
    %p166 = scmp.eq.s32.totalorder %s16, 0
    %p167 = por %p165, %p166
    %p168 = scmp.ne.s32.totalorder %s160, %s162
    %p169 = scmp.eq.s32.totalorder %s21, 3
    %p170 = por %p168, %p169
    %p171 = scmp.ne.s32.totalorder %s162, %s163
    %p172 = scmp.eq.s32.totalorder %s21, 0
    %p173 = por %p171, %p172
    %p174 = scmp.ne.s32.totalorder %s162, %s163
    %p175 = scmp.eq.s32.totalorder %s22, 3
    %p176 = por %p174, %p175
    %p178 = scmp.ne.s32.totalorder %s163, %s177
    %p179 = scmp.eq.s32.totalorder %s22, 0
    %p180 = por %p178, %p179
    %s182 = sadd.s32 %s181, 1
    %p185 = scmp.eq.s32.totalorder %s16, 3
    %p186 = scmp.ne.s32.totalorder %s181, %s183
    %p187 = scmp.eq.s32.totalorder %s16, 0
    %p188 = por %p186, %p187
    %p189 = scmp.ne.s32.totalorder %s181, %s183
    %p190 = scmp.eq.s32.totalorder %s21, 3
    %p191 = por %p189, %p190
    %p192 = scmp.ne.s32.totalorder %s183, %s184
    %p193 = scmp.eq.s32.totalorder %s21, 0
    %p194 = por %p192, %p193
    %p195 = scmp.ne.s32.totalorder %s183, %s184
    %p196 = scmp.eq.s32.totalorder %s22, 3
    %p197 = por %p195, %p196
    %p199 = scmp.ne.s32.totalorder %s184, %s198
    %p200 = scmp.eq.s32.totalorder %s22, 0
    %p201 = por %p199, %p200
    %s202 = ssub.s32 %s16, %s23
    %p203 = scmp.eq.s32.totalorder %s202, 0
    %s205 = sadd.s32 %s204, 1
    %s206 = scalar_select %p203, %s204, %s205
    %p209 = pneg %p203
    %p210 = scmp.eq.s32.totalorder %s16, 3
    %p211 = por %p209, %p210
    %p212 = scmp.ne.s32.totalorder %s204, %s207
    %p213 = scmp.eq.s32.totalorder %s16, 0
    %p214 = por %p212, %p213
    %p215 = scmp.ne.s32.totalorder %s204, %s207
    %p216 = scmp.eq.s32.totalorder %s21, 3
    %p217 = por %p215, %p216
    %p218 = scmp.ne.s32.totalorder %s207, %s208
    %p219 = scmp.eq.s32.totalorder %s21, 0
    %p220 = por %p218, %p219
    %p221 = scmp.ne.s32.totalorder %s207, %s208
    %p222 = scmp.eq.s32.totalorder %s22, 3
    %p223 = por %p221, %p222
    %p225 = scmp.ne.s32.totalorder %s208, %s224
    %p226 = scmp.eq.s32.totalorder %s22, 0
    %p227 = por %p225, %p226
    %p228 = scmp.le.s32.totalorder 1, %s16
    %p229 = scmp.lt.s32.totalorder %s16, 5
    %p230 = pnand %p228, %p229
    %p231 = pneg %p230
    // Predicated region
    $region9: #{tpu_custom_call.1} parent=5 // pred_check
      _
    $region10: #{tpu_custom_call.1} parent=5 // pred_check_branch
      %233 = sbr.rel (%p230) target = $region12
    $region11: #{tpu_custom_call.1} parent=5 // pred_region
      %s234 = ssub.s32 %s16, 1
      // Predicated region
      $region13: #{tpu_custom_call.1} parent=11 // pred_check
        %p235 = pneg %p63
      $region14: #{tpu_custom_call.1} parent=11 // pred_check_branch
        %237 = sbr.rel (%p235) target = $region16
      $region15: #{tpu_custom_call.1} parent=11 // pred_region
        _
      $region16: #{tpu_custom_call.1} parent=11 // pred_fallthru
        _
      // Predicated region
      $region17: #{tpu_custom_call.1} parent=11 // pred_check
        %p238 = pneg %p84
      $region18: #{tpu_custom_call.1} parent=11 // pred_check_branch
        %240 = sbr.rel (%p238) target = $region20
      $region19: #{tpu_custom_call.1} parent=11 // pred_region
        _
      $region20: #{tpu_custom_call.1} parent=11 // pred_fallthru
        _
      // Predicated region
      $region21: #{tpu_custom_call.1} parent=11 // pred_check
        %p241 = pneg %p105
      $region22: #{tpu_custom_call.1} parent=11 // pred_check_branch
        %243 = sbr.rel (%p241) target = $region24
      $region23: #{tpu_custom_call.1} parent=11 // pred_region
        _
      $region24: #{tpu_custom_call.1} parent=11 // pred_fallthru
        _
      // Predicated region
      $region25: #{tpu_custom_call.1} parent=11 // pred_check
        %p244 = pneg %p126
      $region26: #{tpu_custom_call.1} parent=11 // pred_check_branch
        %246 = sbr.rel (%p244) target = $region28
      $region27: #{tpu_custom_call.1} parent=11 // pred_region
        _
      $region28: #{tpu_custom_call.1} parent=11 // pred_fallthru
        _
      // Predicated region
      $region29: #{tpu_custom_call.1} parent=11 // pred_check
        %p247 = pneg %p173
      $region30: #{tpu_custom_call.1} parent=11 // pred_check_branch
        %249 = sbr.rel (%p247) target = $region32
      $region31: #{tpu_custom_call.1} parent=11 // pred_region
        _
      $region32: #{tpu_custom_call.1} parent=11 // pred_fallthru
        _
      // Predicated region
      $region33: #{tpu_custom_call.1} parent=11 // pred_check
        %p250 = pneg %p194
      $region34: #{tpu_custom_call.1} parent=11 // pred_check_branch
        %252 = sbr.rel (%p250) target = $region36
      $region35: #{tpu_custom_call.1} parent=11 // pred_region
        _
      $region36: #{tpu_custom_call.1} parent=11 // pred_fallthru
        _
    $region12: #{tpu_custom_call.1} parent=5 // pred_fallthru
      _
    %p253 = scmp.lt.s32.totalorder %s16, 4
    // Predicated region
    $region37: #{tpu_custom_call.1} parent=5 // pred_check
      %p254 = pneg %p253
    $region38: #{tpu_custom_call.1} parent=5 // pred_check_branch
      %256 = sbr.rel (%p254) target = $region40
    $region39: #{tpu_custom_call.1} parent=5 // pred_region
      // Predicated region
      $region41: #{tpu_custom_call.1} parent=39 // pred_check
        %p257 = pneg %p36
      $region42: #{tpu_custom_call.1} parent=39 // pred_check_branch
        %259 = sbr.rel (%p257) target = $region44
      $region43: #{tpu_custom_call.1} parent=39 // pred_region
        %s260 = smul.u32 2, %s16
        %p261 = scmp.lt.s32.totalorder %s260, 7
        %s262 = scalar_select %p261, %s260, 7
        %s263 = smul.addr %s262, 8
        %s264 = scalar_lea.vmem %s0, %s263
        %s265 = smul.u32 2, %s16
      $region44: #{tpu_custom_call.1} parent=39 // pred_fallthru
        _
      // Predicated region
      $region45: #{tpu_custom_call.1} parent=39 // pred_check
        %p266 = pneg %p146
      $region46: #{tpu_custom_call.1} parent=39 // pred_check_branch
        %268 = sbr.rel (%p266) target = $region48
      $region47: #{tpu_custom_call.1} parent=39 // pred_region
        %s269 = smul.u32 2, %s16
        %p270 = scmp.lt.s32.totalorder %s269, 7
        %s271 = scalar_select %p270, %s269, 7
        %s272 = smul.addr %s271, 8
        %s273 = scalar_lea.vmem %s5, %s272
        %s274 = smul.u32 2, %s16
      $region48: #{tpu_custom_call.1} parent=39 // pred_fallthru
        _
    $region40: #{tpu_custom_call.1} parent=5 // pred_fallthru
      _
    %p275 = scmp.le.s32.totalorder 1, %s16
    %p276 = scmp.lt.s32.totalorder %s16, 5
    %p277 = pnand %p275, %p276
    %p278 = pneg %p277
    // Predicated region
    $region49: #{tpu_custom_call.1} parent=5 // pred_check
      _
    $region50: #{tpu_custom_call.1} parent=5 // pred_check_branch
      %280 = sbr.rel (%p277) target = $region52
    $region51: #{tpu_custom_call.1} parent=5 // pred_region
      %s281 = ssub.s32 %s16, 1
      %s282 = smul.u32 2, %s21
      %p283 = scmp.lt.s32.totalorder %s282, 7
      %s284 = scalar_select %p283, %s282, 7
      %s285 = smul.addr %s284, 8
      %s286 = scalar_lea.vmem %s0, %s285
      %p287 = pneg %p42
      %p288 = pneg %p39
      %p289 = pneg %p63
      %p290 = pneg %p60
      %p291 = pneg %p84
      %p292 = pneg %p81
      %p293 = pneg %p105
      %p294 = pneg %p102
      %p295 = pneg %p126
      %p296 = pneg %p123
      %s297 = smul.u32 2, %s21
      %p298 = scmp.lt.s32.totalorder %s297, 7
      %s299 = scalar_select %p298, %s297, 7
      %s300 = smul.addr %s299, 8
      %s301 = scalar_lea.vmem %s5, %s300
      %p302 = pneg %p152
      %p303 = pneg %p149
      %p304 = pneg %p173
      %p305 = pneg %p170
      %p306 = pneg %p194
      %p307 = pneg %p191
      %p308 = pneg %p220
      %p309 = pneg %p217
      %s310 = smul.u32 2, %s21
      %p311 = scmp.lt.s32.totalorder %s310, 7
      %s312 = scalar_select %p311, %s310, 7
      %s313 = smul.addr %s312, 8
      %s314 = scalar_lea.vmem %s8, %s313
      %s315 = smul.u32 2, %s21
      %p316 = scmp.lt.s32.totalorder %s315, 7
      %s317 = scalar_select %p316, %s315, 7
      %s318 = smul.addr %s317, 8
      %s319 = scalar_lea.vmem %s0, %s318
      %s320 = smul.u32 2, %s21
      %s321 = smul.u32 2, %s21
      %p322 = scmp.lt.s32.totalorder %s321, 7
      %s323 = scalar_select %p322, %s321, 7
      %s324 = smul.addr %s323, 8
      %s325 = scalar_lea.vmem %s5, %s324
      %s326 = smul.u32 2, %s21
      %s327 = smul.u32 2, %s21
      %p328 = scmp.lt.s32.totalorder %s327, 7
      %s329 = scalar_select %p328, %s327, 7
      %s330 = smul.addr %s329, 8
      %s331 = scalar_lea.vmem %s8, %s330
      %s332 = smul.u32 2, %s21
      %v333 = vld [vmem:[%s319] sm:$0xff]
      %v334 = vld [vmem:[%s319 + $0x8] sm:$0xff]
      %v335 = vld [vmem:[%s1] sm:$0xff]
      %v336 = vld [vmem:[%s1 + $0x8] sm:$0xff]
      %v337 = vld [vmem:[%s1 + $0x10] sm:$0xff]
      %v338 = vld [vmem:[%s1 + $0x18] sm:$0xff]
      %v339 = vld [vmem:[%s2] sm:$0x1]
      %v341 = vlaneseq
      %v342 = vshrl.u32 %v341, 7
      %v343 = vsub.s32 0, %v342
      %v344 = vrot.slane %v339, %v343
      %vm346 = vcmask 261120
      %v348 = vsel %vm346, %v333, 0
      %v351 = vsel %vm346, %v334, 0
      %353 = vmatprep.subr.mxu0 0.0
      %354 = vmatpush1.msra.mxu0 %v335
      %355 = vmatprep.subr.mxu0 0.0
      %356 = vmatpush1.msra.mxu0 %v336
      %357 = vmatprep.subr.mxu0 0.0
      %358 = vmatpush1.msra.mxu0 %v337
      %359 = vmatprep.subr.mxu0 0.0
      %360 = vmatpush1.msra.mxu0 %v338
      %361 = vmatprep.subr.mxu0 0.0
      %362 = vmatpush1.msra.mxu0 0.0
      %363 = vmatprep.subr.mxu0 0.0
      %364 = vmatpush1.msra.mxu0 0.0
      %365 = vmatprep.subr.mxu0 0.0
      %366 = vmatpush1.msra.mxu0 0.0
      %367 = vmatprep.subr.mxu0 0.0
      %368 = vmatpush1.msra.mxu0 0.0
      %369 = vmatprep.subr.mxu0 0.0
      %370 = vmatpush1.msra.mxu0 0.0
      %371 = vmatprep.subr.mxu0 0.0
      %372 = vmatpush1.msra.mxu0 0.0
      %373 = vmatprep.subr.mxu0 0.0
      %374 = vmatpush1.msra.mxu0 0.0
      %375 = vmatprep.subr.mxu0 0.0
      %376 = vmatpush1.msra.mxu0 0.0
      %377 = vmatprep.subr.mxu0 0.0
      %378 = vmatpush1.msra.mxu0 0.0
      %379 = vmatprep.subr.mxu0 0.0
      %380 = vmatpush1.msra.mxu0 0.0
      %381 = vmatprep.subr.mxu0 0.0
      %382 = vmatpush1.msra.mxu0 0.0
      %383 = vmatprep.subr.mxu0 0.0
      %384 = vmatpush1.msra.mxu0 0.0
      %385 = vmatprep.subr.mxu0 0.0
      %386 = vmatpush1.msra.mxu0 0.0
      %387 = vmatprep.subr.mxu0 0.0
      %388 = vmatpush1.msra.mxu0 0.0
      %389 = vmatprep.subr.mxu0 0.0
      %390 = vmatpush1.msra.mxu0 0.0
      %391 = vmatprep.subr.mxu0 0.0
      %392 = vmatpush1.msra.mxu0 0.0
      %393 = vmatprep.subr.mxu0 0.0
      %394 = vmatpush1.msra.mxu0 0.0
      %395 = vmatprep.subr.mxu0 0.0
      %396 = vmatpush1.msra.mxu0 0.0
      %397 = vmatprep.subr.mxu0 0.0
      %398 = vmatpush1.msra.mxu0 0.0
      %399 = vmatprep.subr.mxu0 0.0
      %400 = vmatpush1.msra.mxu0 0.0
      %401 = vmatprep.subr.mxu0 0.0
      %402 = vmatpush1.msra.mxu0 0.0
      %403 = vmatprep.subr.mxu0 0.0
      %404 = vmatpush1.msra.mxu0 0.0
      %405 = vmatprep.subr.mxu0 0.0
      %406 = vmatpush1.msra.mxu0 0.0
      %407 = vmatprep.subr.mxu0 0.0
      %408 = vmatpush1.msra.mxu0 0.0
      %409 = vmatprep.subr.mxu0 0.0
      %410 = vmatpush1.msra.mxu0 0.0
      %411 = vmatprep.subr.mxu0 0.0
      %412 = vmatpush1.msra.mxu0 0.0
      %413 = vmatprep.subr.mxu0 0.0
      %414 = vmatpush1.msra.mxu0 0.0
      %415 = vmatprep.subr.mxu0 0.0
      %416 = vmatpush1.msra.mxu0 0.0
      %417 = vmatprep.mubr.f32.mxu0 0.0
      %418 = vmatmul.mubr.f32.gmra.mrb[0].mxu0 %v348
      %v419 = vpop.f32.mrb[0].mxu0
      %v420 = vadd.f32 %v344, %v419
      %v421 = vpop.f32.mrb[0].mxu0
      %422 = vmatprep.mubr.f32.mxu0 0.0
      %423 = vmatmul.mubr.f32.gmra.mrb[0].mxu0 %v351
      %v424 = vpop.f32.mrb[0].mxu0
      %v425 = vadd.f32 %v344, %v424
      %v426 = vpop.f32.mrb[0].mxu0
      %427 = vdwg.mxu0
      %vm428 = vcmask 130048
      %v429 = vsel %vm428, %v420, -inf
      %430 = vmax.xlane.f32.xlu0 %v429
      %v431 = vpop.xlane.xlu0 %430
      %v432 = vsel %vm428, %v425, -inf
      %433 = vmax.xlane.f32.xlu0 %v432
      %v434 = vpop.xlane.xlu0 %433
      %v435 = vsub.f32 %v420, %v431
      %v436 = vsub.f32 %v425, %v434
      %v437 = vmul.f32 %v435, 1.442695
      %v438 = vpow.pop %v437
      %v439 = vmul.f32 %v436, 1.442695
      %v440 = vpow.pop %v439
      %v441 = vsel %vm428, %v438, 0.0
      %442 = vadd.xlane.f32.xlu0 %v441
      %v443 = vpop.xlane.xlu0 %442
      %v444 = vsel %vm428, %v440, 0.0
      %445 = vadd.xlane.f32.xlu0 %v444
      %v446 = vpop.xlane.xlu0 %445
      %v447 = vrcp.pop %v443
      %v448 = vrcp.pop %v446
      %v449 = vmul.f32 %v438, %v447
      %v450 = vmul.f32 %v440, %v448
      %v451 = vld [vmem:[%s3] sm:$0xff]
      %v452 = vld [vmem:[%s3 + $0x8] sm:$0xff]
      %v453 = vld [vmem:[%s3 + $0x10] sm:$0xff]
      %v454 = vld [vmem:[%s3 + $0x18] sm:$0xff]
      %v455 = vld [vmem:[#allocation2] sm:$0x1]
      %v457 = vlaneseq
      %v458 = vshrl.u32 %v457, 7
      %v459 = vsub.s32 0, %v458
      %v460 = vrot.slane %v455, %v459
      %462 = vmatprep.subr.mxu0 0.0
      %463 = vmatpush1.msra.mxu0 %v451
      %464 = vmatprep.subr.mxu0 0.0
      %465 = vmatpush1.msra.mxu0 %v452
      %466 = vmatprep.subr.mxu0 0.0
      %467 = vmatpush1.msra.mxu0 %v453
      %468 = vmatprep.subr.mxu0 0.0
      %469 = vmatpush1.msra.mxu0 %v454
      %470 = vmatprep.subr.mxu0 0.0
      %471 = vmatpush1.msra.mxu0 0.0
      %472 = vmatprep.subr.mxu0 0.0
      %473 = vmatpush1.msra.mxu0 0.0
      %474 = vmatprep.subr.mxu0 0.0
      %475 = vmatpush1.msra.mxu0 0.0
      %476 = vmatprep.subr.mxu0 0.0
      %477 = vmatpush1.msra.mxu0 0.0
      %478 = vmatprep.subr.mxu0 0.0
      %479 = vmatpush1.msra.mxu0 0.0
      %480 = vmatprep.subr.mxu0 0.0
      %481 = vmatpush1.msra.mxu0 0.0
      %482 = vmatprep.subr.mxu0 0.0
      %483 = vmatpush1.msra.mxu0 0.0
      %484 = vmatprep.subr.mxu0 0.0
      %485 = vmatpush1.msra.mxu0 0.0
      %486 = vmatprep.subr.mxu0 0.0
      %487 = vmatpush1.msra.mxu0 0.0
      %488 = vmatprep.subr.mxu0 0.0
      %489 = vmatpush1.msra.mxu0 0.0
      %490 = vmatprep.subr.mxu0 0.0
      %491 = vmatpush1.msra.mxu0 0.0
      %492 = vmatprep.subr.mxu0 0.0
      %493 = vmatpush1.msra.mxu0 0.0
      %494 = vmatprep.subr.mxu0 0.0
      %495 = vmatpush1.msra.mxu0 0.0
      %496 = vmatprep.subr.mxu0 0.0
      %497 = vmatpush1.msra.mxu0 0.0
      %498 = vmatprep.subr.mxu0 0.0
      %499 = vmatpush1.msra.mxu0 0.0
      %500 = vmatprep.subr.mxu0 0.0
      %501 = vmatpush1.msra.mxu0 0.0
      %502 = vmatprep.subr.mxu0 0.0
      %503 = vmatpush1.msra.mxu0 0.0
      %504 = vmatprep.subr.mxu0 0.0
      %505 = vmatpush1.msra.mxu0 0.0
      %506 = vmatprep.subr.mxu0 0.0
      %507 = vmatpush1.msra.mxu0 0.0
      %508 = vmatprep.subr.mxu0 0.0
      %509 = vmatpush1.msra.mxu0 0.0
      %510 = vmatprep.subr.mxu0 0.0
      %511 = vmatpush1.msra.mxu0 0.0
      %512 = vmatprep.subr.mxu0 0.0
      %513 = vmatpush1.msra.mxu0 0.0
      %514 = vmatprep.subr.mxu0 0.0
      %515 = vmatpush1.msra.mxu0 0.0
      %516 = vmatprep.subr.mxu0 0.0
      %517 = vmatpush1.msra.mxu0 0.0
      %518 = vmatprep.subr.mxu0 0.0
      %519 = vmatpush1.msra.mxu0 0.0
      %520 = vmatprep.subr.mxu0 0.0
      %521 = vmatpush1.msra.mxu0 0.0
      %522 = vmatprep.subr.mxu0 0.0
      %523 = vmatpush1.msra.mxu0 0.0
      %524 = vmatprep.subr.mxu0 0.0
      %525 = vmatpush1.msra.mxu0 0.0
      %526 = vmatprep.mubr.f32.mxu0 0.0
      %527 = vmatmul.mubr.f32.gmra.mrb[0].mxu0 %v348
      %v528 = vpop.f32.mrb[0].mxu0
      %v529 = vadd.f32 %v460, %v528
      %v530 = vpop.f32.mrb[0].mxu0
      %531 = vmatprep.mubr.f32.mxu0 0.0
      %532 = vmatmul.mubr.f32.gmra.mrb[0].mxu0 %v351
      %v533 = vpop.f32.mrb[0].mxu0
      %v534 = vadd.f32 %v460, %v533
      %v535 = vpop.f32.mrb[0].mxu0
      %536 = vdwg.mxu0
      %v537 = vxor.u32 %v529, 2147483648
      %v538 = vxor.u32 %v534, 2147483648
      %v539 = vmul.f32 %v537, 1.442695
      %v540 = vpow.pop %v539
      %v541 = vmul.f32 %v538, 1.442695
      %v542 = vpow.pop %v541
      %v543 = vadd.f32 %v540, 1.0
      %v544 = vadd.f32 %v542, 1.0
      %v545 = vrcp.pop %v543
      %v546 = vmul.f32 1.0, %v545
      %v547 = vrcp.pop %v544
      %v548 = vmul.f32 1.0, %v547
      %v549 = vsub.f32 1.0, %v546
      %v550 = vsub.f32 1.0, %v548
      %552 = vset.pattern.permute.xlu0 0
      %553 = vperm.xlu0 %552, %v549
      %v554 = vpop.permute.xlu0 %553
      %557 = vset.pattern.permute.xlu0 0
      %558 = vperm.xlu0 %557, %v550
      %v559 = vpop.permute.xlu0 %558
      %v561 = vmul.f32 %v449, %v554
      %v562 = vmul.f32 %v450, %v559
      %563 = vst.msk [vmem:[%s331] sm:$0xff] %vm428, %v561
      %564 = vst.msk [vmem:[%s331 + $0x8] sm:$0xff] %vm428, %v562
      %v565 = vld [vmem:[%s325] sm:$0xff]
      %v566 = vld [vmem:[%s325 + $0x8] sm:$0xff]
      %568 = vset.pattern.permute.xlu0 0
      %569 = vperm.xlu0 %568, %v546
      %v570 = vpop.permute.xlu0 %569
      %573 = vset.pattern.permute.xlu0 0
      %574 = vperm.xlu0 %573, %v548
      %v575 = vpop.permute.xlu0 %574
      %v577 = vmul.f32 %v565, %v570
      %v578 = vmul.f32 %v566, %v575
      %v579 = vld [vmem:[%s7] sm:$0xff]
      %v580 = vld [vmem:[%s7 + $0x8] sm:$0xff]
      %v581 = vld [vmem:[%s6] sm:$0xff]
      %vm582 = vcmask 64512
      %v584 = vsel %vm582, %v577, 0
      %v587 = vsel %vm582, %v578, 0
      %589 = vmatprep.subr.mxu0 0.0
      %590 = vmatpush1.msra.mxu0 %v581
      %591 = vmatprep.subr.mxu0 0.0
      %592 = vmatpush1.msra.mxu0 0.0
      %593 = vmatprep.subr.mxu0 0.0
      %594 = vmatpush1.msra.mxu0 0.0
      %595 = vmatprep.subr.mxu0 0.0
      %596 = vmatpush1.msra.mxu0 0.0
      %597 = vmatprep.subr.mxu0 0.0
      %598 = vmatpush1.msra.mxu0 0.0
      %599 = vmatprep.subr.mxu0 0.0
      %600 = vmatpush1.msra.mxu0 0.0
      %601 = vmatprep.subr.mxu0 0.0
      %602 = vmatpush1.msra.mxu0 0.0
      %603 = vmatprep.subr.mxu0 0.0
      %604 = vmatpush1.msra.mxu0 0.0
      %605 = vmatprep.subr.mxu0 0.0
      %606 = vmatpush1.msra.mxu0 0.0
      %607 = vmatprep.subr.mxu0 0.0
      %608 = vmatpush1.msra.mxu0 0.0
      %609 = vmatprep.subr.mxu0 0.0
      %610 = vmatpush1.msra.mxu0 0.0
      %611 = vmatprep.subr.mxu0 0.0
      %612 = vmatpush1.msra.mxu0 0.0
      %613 = vmatprep.subr.mxu0 0.0
      %614 = vmatpush1.msra.mxu0 0.0
      %615 = vmatprep.subr.mxu0 0.0
      %616 = vmatpush1.msra.mxu0 0.0
      %617 = vmatprep.subr.mxu0 0.0
      %618 = vmatpush1.msra.mxu0 0.0
      %619 = vmatprep.subr.mxu0 0.0
      %620 = vmatpush1.msra.mxu0 0.0
      %621 = vmatprep.subr.mxu0 0.0
      %622 = vmatpush1.msra.mxu0 0.0
      %623 = vmatprep.subr.mxu0 0.0
      %624 = vmatpush1.msra.mxu0 0.0
      %625 = vmatprep.subr.mxu0 0.0
      %626 = vmatpush1.msra.mxu0 0.0
      %627 = vmatprep.subr.mxu0 0.0
      %628 = vmatpush1.msra.mxu0 0.0
      %629 = vmatprep.subr.mxu0 0.0
      %630 = vmatpush1.msra.mxu0 0.0
      %631 = vmatprep.subr.mxu0 0.0
      %632 = vmatpush1.msra.mxu0 0.0
      %633 = vmatprep.subr.mxu0 0.0
      %634 = vmatpush1.msra.mxu0 0.0
      %635 = vmatprep.subr.mxu0 0.0
      %636 = vmatpush1.msra.mxu0 0.0
      %637 = vmatprep.subr.mxu0 0.0
      %638 = vmatpush1.msra.mxu0 0.0
      %639 = vmatprep.subr.mxu0 0.0
      %640 = vmatpush1.msra.mxu0 0.0
      %641 = vmatprep.subr.mxu0 0.0
      %642 = vmatpush1.msra.mxu0 0.0
      %643 = vmatprep.subr.mxu0 0.0
      %644 = vmatpush1.msra.mxu0 0.0
      %645 = vmatprep.subr.mxu0 0.0
      %646 = vmatpush1.msra.mxu0 0.0
      %647 = vmatprep.subr.mxu0 0.0
      %648 = vmatpush1.msra.mxu0 0.0
      %649 = vmatprep.subr.mxu0 0.0
      %650 = vmatpush1.msra.mxu0 0.0
      %651 = vmatprep.subr.mxu0 0.0
      %652 = vmatpush1.msra.mxu0 0.0
      %653 = vmatprep.mubr.f32.mxu0 0.0
      %654 = vmatmul.mubr.f32.gmra.mrb[0].mxu0 %v584
      %v655 = vpop.f32.mrb[0].mxu0
      %v656 = vadd.f32 0.0, %v655
      %v657 = vpop.f32.mrb[0].mxu0
      %658 = vmatprep.mubr.f32.mxu0 0.0
      %659 = vmatmul.mubr.f32.gmra.mrb[0].mxu0 %v587
      %v660 = vpop.f32.mrb[0].mxu0
      %v661 = vadd.f32 0.0, %v660
      %v662 = vpop.f32.mrb[0].mxu0
      %663 = vdwg.mxu0
      %vm664 = vcmp.eq.s32.totalorder %v579, 0
      %vm665 = vcmp.eq.s32.totalorder %v580, 0
      %v666 = vsel %vm664, 1, 0
      %v667 = vsel %vm665, 1, 0
      %668 = vset.pattern.permute.xlu0 0
      %669 = vperm.xlu0 %668, %v666
      %v670 = vpop.permute.xlu0 %669
      %671 = vset.pattern.permute.xlu0 0
      %672 = vperm.xlu0 %671, %v667
      %v673 = vpop.permute.xlu0 %672
      %vm674 = vcmp.eq.s32.totalorder %v670, 1
      %vm675 = vcmp.eq.s32.totalorder %v673, 1
      %v676 = vsel %vm674, %v656, 0.0
      %v677 = vsel %vm675, %v661, 0.0
      %v678 = vld [vmem:[%s6 + $0x8] sm:$0xff]
      %679 = vmatprep.subr.mxu0 0.0
      %680 = vmatpush1.msra.mxu0 %v678
      %681 = vmatprep.subr.mxu0 0.0
      %682 = vmatpush1.msra.mxu0 0.0
      %683 = vmatprep.subr.mxu0 0.0
      %684 = vmatpush1.msra.mxu0 0.0
      %685 = vmatprep.subr.mxu0 0.0
      %686 = vmatpush1.msra.mxu0 0.0
      %687 = vmatprep.subr.mxu0 0.0
      %688 = vmatpush1.msra.mxu0 0.0
      %689 = vmatprep.subr.mxu0 0.0
      %690 = vmatpush1.msra.mxu0 0.0
      %691 = vmatprep.subr.mxu0 0.0
      %692 = vmatpush1.msra.mxu0 0.0
      %693 = vmatprep.subr.mxu0 0.0
      %694 = vmatpush1.msra.mxu0 0.0
      %695 = vmatprep.subr.mxu0 0.0
      %696 = vmatpush1.msra.mxu0 0.0
      %697 = vmatprep.subr.mxu0 0.0
      %698 = vmatpush1.msra.mxu0 0.0
      %699 = vmatprep.subr.mxu0 0.0
      %700 = vmatpush1.msra.mxu0 0.0
      %701 = vmatprep.subr.mxu0 0.0
      %702 = vmatpush1.msra.mxu0 0.0
      %703 = vmatprep.subr.mxu0 0.0
      %704 = vmatpush1.msra.mxu0 0.0
      %705 = vmatprep.subr.mxu0 0.0
      %706 = vmatpush1.msra.mxu0 0.0
      %707 = vmatprep.subr.mxu0 0.0
      %708 = vmatpush1.msra.mxu0 0.0
      %709 = vmatprep.subr.mxu0 0.0
      %710 = vmatpush1.msra.mxu0 0.0
      %711 = vmatprep.subr.mxu0 0.0
      %712 = vmatpush1.msra.mxu0 0.0
      %713 = vmatprep.subr.mxu0 0.0
      %714 = vmatpush1.msra.mxu0 0.0
      %715 = vmatprep.subr.mxu0 0.0
      %716 = vmatpush1.msra.mxu0 0.0
      %717 = vmatprep.subr.mxu0 0.0
      %718 = vmatpush1.msra.mxu0 0.0
      %719 = vmatprep.subr.mxu0 0.0
      %720 = vmatpush1.msra.mxu0 0.0
      %721 = vmatprep.subr.mxu0 0.0
      %722 = vmatpush1.msra.mxu0 0.0
      %723 = vmatprep.subr.mxu0 0.0
      %724 = vmatpush1.msra.mxu0 0.0
      %725 = vmatprep.subr.mxu0 0.0
      %726 = vmatpush1.msra.mxu0 0.0
      %727 = vmatprep.subr.mxu0 0.0
      %728 = vmatpush1.msra.mxu0 0.0
      %729 = vmatprep.subr.mxu0 0.0
      %730 = vmatpush1.msra.mxu0 0.0
      %731 = vmatprep.subr.mxu0 0.0
      %732 = vmatpush1.msra.mxu0 0.0
      %733 = vmatprep.subr.mxu0 0.0
      %734 = vmatpush1.msra.mxu0 0.0
      %735 = vmatprep.subr.mxu0 0.0
      %736 = vmatpush1.msra.mxu0 0.0
      %737 = vmatprep.subr.mxu0 0.0
      %738 = vmatpush1.msra.mxu0 0.0
      %739 = vmatprep.subr.mxu0 0.0
      %740 = vmatpush1.msra.mxu0 0.0
      %741 = vmatprep.subr.mxu0 0.0
      %742 = vmatpush1.msra.mxu0 0.0
      %743 = vmatprep.mubr.f32.mxu0 0.0
      %744 = vmatmul.mubr.f32.gmra.mrb[0].mxu0 %v584
      %v745 = vpop.f32.mrb[0].mxu0
      %v746 = vadd.f32 0.0, %v745
      %v747 = vpop.f32.mrb[0].mxu0
      %748 = vmatprep.mubr.f32.mxu0 0.0
      %749 = vmatmul.mubr.f32.gmra.mrb[0].mxu0 %v587
      %v750 = vpop.f32.mrb[0].mxu0
      %v751 = vadd.f32 0.0, %v750
      %v752 = vpop.f32.mrb[0].mxu0
      %753 = vdwg.mxu0
      %vm754 = vcmp.eq.s32.totalorder %v579, 1
      %vm755 = vcmp.eq.s32.totalorder %v580, 1
      %v756 = vsel %vm754, 1, 0
      %v757 = vsel %vm755, 1, 0
      %758 = vset.pattern.permute.xlu0 0
      %759 = vperm.xlu0 %758, %v756
      %v760 = vpop.permute.xlu0 %759
      %761 = vset.pattern.permute.xlu0 0
      %762 = vperm.xlu0 %761, %v757
      %v763 = vpop.permute.xlu0 %762
      %vm764 = vcmp.eq.s32.totalorder %v760, 1
      %vm765 = vcmp.eq.s32.totalorder %v763, 1
      %v766 = vsel %vm764, %v746, %v676
      %v767 = vsel %vm765, %v751, %v677
      %770 = vrot.lane.b32.xlu0 %v766, 16
      %v771 = vpop.permute.xlu0 %770
      %772 = vrot.lane.b32.xlu0 %v767, 16
      %v773 = vpop.permute.xlu0 %772
      %vm776 = vcmask 195712
      %777 = vst.msk [vmem:[%s331] sm:$0xff] %vm776, %v771
      %778 = vst.msk [vmem:[%s331 + $0x8] sm:$0xff] %vm776, %v773
      %s779 = smul.u32 2, %s21
      %p780 = scmp.lt.s32.totalorder %s779, 7
      %s781 = scalar_select %p780, %s779, 7
      %s782 = smul.addr %s781, 8
      %s783 = scalar_lea.vmem %s8, %s782
      // Predicated region
      $region53: #{tpu_custom_call.1} parent=51 // pred_check
        %p784 = pneg %p217
      $region54: #{tpu_custom_call.1} parent=51 // pred_check_branch
        %786 = sbr.rel (%p784) target = $region56
      $region55: #{tpu_custom_call.1} parent=51 // pred_region
        %s787 = smul.u32 2, %s21
      $region56: #{tpu_custom_call.1} parent=51 // pred_fallthru
        _
    $region52: #{tpu_custom_call.1} parent=5 // pred_fallthru
      _
    %p788 = scmp.le.s32.totalorder 2, %s16
    // Predicated region
    $region57: #{tpu_custom_call.1} parent=5 // pred_check
      %p789 = pneg %p788
    $region58: #{tpu_custom_call.1} parent=5 // pred_check_branch
      %791 = sbr.rel (%p789) target = $region60
    $region59: #{tpu_custom_call.1} parent=5 // pred_region
      %s792 = ssub.s32 %s16, 2
      // Predicated region
      $region61: #{tpu_custom_call.1} parent=59 // pred_check
        %p793 = pneg %p223
      $region62: #{tpu_custom_call.1} parent=59 // pred_check_branch
        %795 = sbr.rel (%p793) target = $region64
      $region63: #{tpu_custom_call.1} parent=59 // pred_region
        %s796 = smul.u32 2, %s22
        %p797 = scmp.lt.s32.totalorder %s796, 7
        %s798 = scalar_select %p797, %s796, 7
        %s799 = smul.addr %s798, 8
        %s800 = scalar_lea.vmem %s8, %s799
      $region64: #{tpu_custom_call.1} parent=59 // pred_fallthru
        _
    $region60: #{tpu_custom_call.1} parent=5 // pred_fallthru
      _
  $region6: #{tpu_custom_call.1} parent=0 // loop_footer
    %s20 = sadd.s32 1, %s16
  $region7: #{tpu_custom_call.1} parent=0 // loop_footer_branch
    %15 = sbr.rel target = $region3
  $region8: #{tpu_custom_call.1} parent=0 // loop_exit
    _

</llo_original>
